<compile_context>
chip_gen: v5e
topology: v5e:2x2
jax: 0.10.0
libtpu: 0.0.40
codegen_flags: <defaults>
</compile_context>

<pallas_src>
import jax
import jax.numpy as jnp
import numpy as np
from jax.experimental import pallas as pl
from jax.experimental.pallas import tpu as pltpu


def _round_up(x, m):
    return (x + m - 1) // m * m


# --------------------------------------------------------------------------
# Kernel 1: embedding gather (format='index')
# One grid step per TOK tokens; ids are scalar-prefetched into SMEM and drive
# per-row async copies from the HBM-resident table into a VMEM staging buffer.
# --------------------------------------------------------------------------
def _make_gather_kernel(tok_block):
    def kernel(ids_ref, w_hbm, out_ref, buf, sem):
        i = pl.program_id(0)
        base = i * tok_block
        # Issue all TOK row fetches (overlapped), then wait for all of them.
        for j in range(tok_block):
            pltpu.make_async_copy(
                w_hbm.at[ids_ref[base + j]], buf.at[j], sem.at[j]
            ).start()
        for j in range(tok_block):
            pltpu.make_async_copy(w_hbm.at[0], buf.at[j], sem.at[j]).wait()
        # Single dense (TOK, ninp) store into the pipelined output block.
        out_ref[...] = buf[...]

    return kernel


def embed_index(weight, ids_flat, *, max_tok_block=32):
    ntoken, ninp = weight.shape
    n = ids_flat.shape[0]

    tok = min(max_tok_block, _round_up(n, 8))   # sublane-dense, multiple of 8
    n_pad = _round_up(n, tok)

    ids = jnp.clip(ids_flat.astype(jnp.int32), 0, ntoken - 1)
    if n_pad != n:
        ids = jnp.concatenate([ids, jnp.zeros((n_pad - n,), jnp.int32)])

    out = pl.pallas_call(
        _make_gather_kernel(tok),
        out_shape=jax.ShapeDtypeStruct((n_pad, ninp), weight.dtype),
        grid_spec=pltpu.PrefetchScalarGridSpec(
            num_scalar_prefetch=1,
            grid=(n_pad // tok,),
            in_specs=[pl.BlockSpec(memory_space=pl.ANY)],   # W stays in HBM
            out_specs=pl.BlockSpec((tok, ninp), lambda i, ids_ref: (i, 0)),
            scratch_shapes=[
                pltpu.VMEM((tok, ninp), weight.dtype),
                pltpu.SemaphoreType.DMA((tok,)),
            ],
        ),
        compiler_params=pltpu.CompilerParams(
            dimension_semantics=("parallel",),
        ),
    )(ids, weight)
    return out[:n]


# --------------------------------------------------------------------------
# Kernel 2: shared-weight linear (format='onehot'):  out = onehot @ W
# Standard tiled matmul with f32 accumulator so it scales to real vocab sizes.
# --------------------------------------------------------------------------
def _matmul_kernel(x_ref, w_ref, o_ref, acc_ref):
    @pl.when(pl.program_id(2) == 0)
    def _():
        acc_ref[...] = jnp.zeros_like(acc_ref)

    acc_ref[...] += jnp.dot(
        x_ref[...], w_ref[...], preferred_element_type=jnp.float32
    )

    @pl.when(pl.program_id(2) == pl.num_programs(2) - 1)
    def _():
        o_ref[...] = acc_ref[...].astype(o_ref.dtype)


def embed_onehot(weight, onehot):
    ntoken, ninp = weight.shape
    m, k = onehot.shape
    assert k == ntoken
    x = onehot.astype(weight.dtype)

    # Tile sizes: M sublane-dense (>=8), Nout/K lane-dense (multiples of 128).
    # K tile kept modest so double-buffered tiles fit v7x's smaller VMEM.
    tm = min(128, _round_up(m, 8))
    tn = min(512, _round_up(ninp, 128))
    tk = min(512, _round_up(ntoken, 128))

    mp = _round_up(m, tm)
    kp = _round_up(ntoken, tk)
    np_ = _round_up(ninp, tn)

    if (mp, kp) != (m, ntoken):
        x = jnp.pad(x, ((0, mp - m), (0, kp - ntoken)))
    w = weight
    if (kp, np_) != (ntoken, ninp):
        w = jnp.pad(w, ((0, kp - ntoken), (0, np_ - ninp)))

    out = pl.pallas_call(
        _matmul_kernel,
        out_shape=jax.ShapeDtypeStruct((mp, np_), weight.dtype),
        grid_spec=pltpu.PrefetchScalarGridSpec(
            num_scalar_prefetch=0,
            grid=(mp // tm, np_ // tn, kp // tk),
            in_specs=[
                pl.BlockSpec((tm, tk), lambda i, j, kk: (i, kk)),
                pl.BlockSpec((tk, tn), lambda i, j, kk: (kk, j)),
            ],
            out_specs=pl.BlockSpec((tm, tn), lambda i, j, kk: (i, j)),
            scratch_shapes=[pltpu.VMEM((tm, tn), jnp.float32)],
        ),
        compiler_params=pltpu.CompilerParams(
            dimension_semantics=("parallel", "parallel", "arbitrary"),
            vmem_limit_bytes=32 * 1024 * 1024,
        ),
    )(x, w)
    return out[:m, :ninp]


# --------------------------------------------------------------------------
# Module-equivalent wrapper
# --------------------------------------------------------------------------
class NetW:
    def __init__(self, ntoken, ninp, dropout, key):
        initrange = 0.1
        # nn.Embedding weight, then init_weights(): uniform_(-0.1, 0.1)
        # (init_weights re-randomizes row 0 despite padding_idx, as in PyTorch).
        self.weight = jax.random.uniform(
            key, (ntoken, ninp), dtype=jnp.float32,
            minval=-initrange, maxval=initrange)
        self.d = dropout
        self.training = False  # inference: F.dropout(training=False) == identity
        # TODO(synk): training-mode dropout (Bernoulli mask + 1/(1-p) scale) not
        # implemented; PyTorch RNG stream cannot be reproduced bit-exactly anyway.

    def forward(self, inp, format='index'):
        if format == 'onehot':
            out = embed_onehot(self.weight, inp.astype(self.weight.dtype))
        elif format == 'index':
            b, s = inp.shape
            ids_flat = inp.reshape(-1).astype(jnp.int32)
            out = embed_index(self.weight, ids_flat).reshape(b, s, -1)
        else:
            raise ValueError(format)
        return out  # dropout is identity in eval mode


if __name__ == "__main__":
    key = jax.random.PRNGKey(0)
    k_w, k_idx = jax.random.split(key)

    ntoken, ninp = 128, 256
    batch, seq = 2, 8

    net = NetW(ntoken, ninp, dropout=0.5, key=k_w)

    # ---- format='index' path ----
    ids = jax.random.randint(k_idx, (batch, seq), 0, ntoken, dtype=jnp.int32)
    out_idx = net.forward(ids, format='index')
    out_idx = jax.block_until_ready(out_idx)
    ref_idx = jnp.take(net.weight, ids.reshape(-1), axis=0).reshape(batch, seq, ninp)
    assert out_idx.shape == (batch, seq, ninp)
    np.testing.assert_allclose(np.asarray(out_idx), np.asarray(ref_idx),
                               rtol=1e-6, atol=1e-6)

    # ---- format='onehot' path ----
    onehot = jax.nn.one_hot(ids.reshape(-1), ntoken, dtype=jnp.float32)
    out_oh = net.forward(onehot, format='onehot')
    out_oh = jax.block_until_ready(out_oh)
    ref_oh = onehot @ net.weight
    assert out_oh.shape == (batch * seq, ninp)
    np.testing.assert_allclose(np.asarray(out_oh), np.asarray(ref_oh),
                               rtol=1e-5, atol=1e-5)

    print("KERNEL_OK")
</pallas_src>

<mosaic_0001>
module attributes {stable_mosaic.version = 11 : i64} {
  func.func @kernel(%arg0: i32, %arg1: memref<16xi32, #tpu.memory_space<smem>>, %arg2: memref<128x256xf32, #tpu.memory_space<any>>, %arg3: memref<16x256xf32, #tpu.memory_space<vmem>>, %arg4: memref<16x256xf32, #tpu.memory_space<vmem>>, %arg5: memref<16x!tpu.dma_semaphore, #tpu.memory_space<semaphore_mem>>) attributes {dimension_semantics = [#tpu.dimension_semantics<parallel>], iteration_bounds = array<i64: 1>, scalar_prefetch = 1 : i64, scratch_operands = 2 : i64, tpu.core_type = #tpu.core_type<tc>, window_params = [{}, {transform_indices = @transform_1, window_bounds = array<i64: 16, 256>}]} {
    %c16_i32 = arith.constant 16 : i32
    %0 = arith.muli %arg0, %c16_i32 : i32
    %c0_i32 = arith.constant 0 : i32
    %1 = arith.addi %0, %c0_i32 : i32
    %2 = arith.index_cast %1 : i32 to index
    %3 = memref.load %arg1[%2] : memref<16xi32, #tpu.memory_space<smem>>
    %c0_i32_0 = arith.constant 0 : i32
    %c0_i32_1 = arith.constant 0 : i32
    %c0_i32_2 = arith.constant 0 : i32
    %4 = tpu.memref_slice %arg2[%3, %c0_i32_2] : memref<128x256xf32, #tpu.memory_space<any>> -> memref<1x256xf32, #tpu.memory_space<any>>
    %5 = tpu.memref_squeeze %4 : memref<1x256xf32, #tpu.memory_space<any>> -> memref<256xf32, #tpu.memory_space<any>>
    %c0_i32_3 = arith.constant 0 : i32
    %6 = tpu.memref_slice %arg4[%c0_i32_0, %c0_i32_3] : memref<16x256xf32, #tpu.memory_space<vmem>> -> memref<1x256xf32, #tpu.memory_space<vmem>>
    %7 = tpu.memref_squeeze %6 : memref<1x256xf32, #tpu.memory_space<vmem>> -> memref<256xf32, #tpu.memory_space<vmem>>
    %8 = tpu.memref_slice %arg5[%c0_i32_1] : memref<16x!tpu.dma_semaphore, #tpu.memory_space<semaphore_mem>> -> memref<1x!tpu.dma_semaphore, #tpu.memory_space<semaphore_mem>>
    %9 = tpu.memref_squeeze %8 : memref<1x!tpu.dma_semaphore, #tpu.memory_space<semaphore_mem>> -> memref<!tpu.dma_semaphore, #tpu.memory_space<semaphore_mem>>
    tpu.enqueue_dma source(%5 : memref<256xf32, #tpu.memory_space<any>>) target(%7 : memref<256xf32, #tpu.memory_space<vmem>>) target_semaphore(%9 : memref<!tpu.dma_semaphore, #tpu.memory_space<semaphore_mem>>)
    %c1_i32 = arith.constant 1 : i32
    %10 = arith.addi %0, %c1_i32 : i32
    %11 = arith.index_cast %10 : i32 to index
    %12 = memref.load %arg1[%11] : memref<16xi32, #tpu.memory_space<smem>>
    %c1_i32_4 = arith.constant 1 : i32
    %c1_i32_5 = arith.constant 1 : i32
    %c0_i32_6 = arith.constant 0 : i32
    %13 = tpu.memref_slice %arg2[%12, %c0_i32_6] : memref<128x256xf32, #tpu.memory_space<any>> -> memref<1x256xf32, #tpu.memory_space<any>>
    %14 = tpu.memref_squeeze %13 : memref<1x256xf32, #tpu.memory_space<any>> -> memref<256xf32, #tpu.memory_space<any>>
    %c0_i32_7 = arith.constant 0 : i32
    %15 = tpu.memref_slice %arg4[%c1_i32_4, %c0_i32_7] : memref<16x256xf32, #tpu.memory_space<vmem>> -> memref<1x256xf32, #tpu.memory_space<vmem>>
    %16 = tpu.memref_squeeze %15 : memref<1x256xf32, #tpu.memory_space<vmem>> -> memref<256xf32, #tpu.memory_space<vmem>>
    %17 = tpu.memref_slice %arg5[%c1_i32_5] : memref<16x!tpu.dma_semaphore, #tpu.memory_space<semaphore_mem>> -> memref<1x!tpu.dma_semaphore, #tpu.memory_space<semaphore_mem>>
    %18 = tpu.memref_squeeze %17 : memref<1x!tpu.dma_semaphore, #tpu.memory_space<semaphore_mem>> -> memref<!tpu.dma_semaphore, #tpu.memory_space<semaphore_mem>>
    tpu.enqueue_dma source(%14 : memref<256xf32, #tpu.memory_space<any>>) target(%16 : memref<256xf32, #tpu.memory_space<vmem>>) target_semaphore(%18 : memref<!tpu.dma_semaphore, #tpu.memory_space<semaphore_mem>>)
    %c2_i32 = arith.constant 2 : i32
    %19 = arith.addi %0, %c2_i32 : i32
    %20 = arith.index_cast %19 : i32 to index
    %21 = memref.load %arg1[%20] : memref<16xi32, #tpu.memory_space<smem>>
    %c2_i32_8 = arith.constant 2 : i32
    %c2_i32_9 = arith.constant 2 : i32
    %c0_i32_10 = arith.constant 0 : i32
    %22 = tpu.memref_slice %arg2[%21, %c0_i32_10] : memref<128x256xf32, #tpu.memory_space<any>> -> memref<1x256xf32, #tpu.memory_space<any>>
    %23 = tpu.memref_squeeze %22 : memref<1x256xf32, #tpu.memory_space<any>> -> memref<256xf32, #tpu.memory_space<any>>
    %c0_i32_11 = arith.constant 0 : i32
    %24 = tpu.memref_slice %arg4[%c2_i32_8, %c0_i32_11] : memref<16x256xf32, #tpu.memory_space<vmem>> -> memref<1x256xf32, #tpu.memory_space<vmem>>
    %25 = tpu.memref_squeeze %24 : memref<1x256xf32, #tpu.memory_space<vmem>> -> memref<256xf32, #tpu.memory_space<vmem>>
    %26 = tpu.memref_slice %arg5[%c2_i32_9] : memref<16x!tpu.dma_semaphore, #tpu.memory_space<semaphore_mem>> -> memref<1x!tpu.dma_semaphore, #tpu.memory_space<semaphore_mem>>
    %27 = tpu.memref_squeeze %26 : memref<1x!tpu.dma_semaphore, #tpu.memory_space<semaphore_mem>> -> memref<!tpu.dma_semaphore, #tpu.memory_space<semaphore_mem>>
    tpu.enqueue_dma source(%23 : memref<256xf32, #tpu.memory_space<any>>) target(%25 : memref<256xf32, #tpu.memory_space<vmem>>) target_semaphore(%27 : memref<!tpu.dma_semaphore, #tpu.memory_space<semaphore_mem>>)
    %c3_i32 = arith.constant 3 : i32
    %28 = arith.addi %0, %c3_i32 : i32
    %29 = arith.index_cast %28 : i32 to index
    %30 = memref.load %arg1[%29] : memref<16xi32, #tpu.memory_space<smem>>
    %c3_i32_12 = arith.constant 3 : i32
    %c3_i32_13 = arith.constant 3 : i32
    %c0_i32_14 = arith.constant 0 : i32
    %31 = tpu.memref_slice %arg2[%30, %c0_i32_14] : memref<128x256xf32, #tpu.memory_space<any>> -> memref<1x256xf32, #tpu.memory_space<any>>
    %32 = tpu.memref_squeeze %31 : memref<1x256xf32, #tpu.memory_space<any>> -> memref<256xf32, #tpu.memory_space<any>>
    %c0_i32_15 = arith.constant 0 : i32
    %33 = tpu.memref_slice %arg4[%c3_i32_12, %c0_i32_15] : memref<16x256xf32, #tpu.memory_space<vmem>> -> memref<1x256xf32, #tpu.memory_space<vmem>>
    %34 = tpu.memref_squeeze %33 : memref<1x256xf32, #tpu.memory_space<vmem>> -> memref<256xf32, #tpu.memory_space<vmem>>
    %35 = tpu.memref_slice %arg5[%c3_i32_13] : memref<16x!tpu.dma_semaphore, #tpu.memory_space<semaphore_mem>> -> memref<1x!tpu.dma_semaphore, #tpu.memory_space<semaphore_mem>>
    %36 = tpu.memref_squeeze %35 : memref<1x!tpu.dma_semaphore, #tpu.memory_space<semaphore_mem>> -> memref<!tpu.dma_semaphore, #tpu.memory_space<semaphore_mem>>
    tpu.enqueue_dma source(%32 : memref<256xf32, #tpu.memory_space<any>>) target(%34 : memref<256xf32, #tpu.memory_space<vmem>>) target_semaphore(%36 : memref<!tpu.dma_semaphore, #tpu.memory_space<semaphore_mem>>)
    %c4_i32 = arith.constant 4 : i32
    %37 = arith.addi %0, %c4_i32 : i32
    %38 = arith.index_cast %37 : i32 to index
    %39 = memref.load %arg1[%38] : memref<16xi32, #tpu.memory_space<smem>>
    %c4_i32_16 = arith.constant 4 : i32
    %c4_i32_17 = arith.constant 4 : i32
    %c0_i32_18 = arith.constant 0 : i32
    %40 = tpu.memref_slice %arg2[%39, %c0_i32_18] : memref<128x256xf32, #tpu.memory_space<any>> -> memref<1x256xf32, #tpu.memory_space<any>>
    %41 = tpu.memref_squeeze %40 : memref<1x256xf32, #tpu.memory_space<any>> -> memref<256xf32, #tpu.memory_space<any>>
    %c0_i32_19 = arith.constant 0 : i32
    %42 = tpu.memref_slice %arg4[%c4_i32_16, %c0_i32_19] : memref<16x256xf32, #tpu.memory_space<vmem>> -> memref<1x256xf32, #tpu.memory_space<vmem>>
    %43 = tpu.memref_squeeze %42 : memref<1x256xf32, #tpu.memory_space<vmem>> -> memref<256xf32, #tpu.memory_space<vmem>>
    %44 = tpu.memref_slice %arg5[%c4_i32_17] : memref<16x!tpu.dma_semaphore, #tpu.memory_space<semaphore_mem>> -> memref<1x!tpu.dma_semaphore, #tpu.memory_space<semaphore_mem>>
    %45 = tpu.memref_squeeze %44 : memref<1x!tpu.dma_semaphore, #tpu.memory_space<semaphore_mem>> -> memref<!tpu.dma_semaphore, #tpu.memory_space<semaphore_mem>>
    tpu.enqueue_dma source(%41 : memref<256xf32, #tpu.memory_space<any>>) target(%43 : memref<256xf32, #tpu.memory_space<vmem>>) target_semaphore(%45 : memref<!tpu.dma_semaphore, #tpu.memory_space<semaphore_mem>>)
    %c5_i32 = arith.constant 5 : i32
    %46 = arith.addi %0, %c5_i32 : i32
    %47 = arith.index_cast %46 : i32 to index
    %48 = memref.load %arg1[%47] : memref<16xi32, #tpu.memory_space<smem>>
    %c5_i32_20 = arith.constant 5 : i32
    %c5_i32_21 = arith.constant 5 : i32
    %c0_i32_22 = arith.constant 0 : i32
    %49 = tpu.memref_slice %arg2[%48, %c0_i32_22] : memref<128x256xf32, #tpu.memory_space<any>> -> memref<1x256xf32, #tpu.memory_space<any>>
    %50 = tpu.memref_squeeze %49 : memref<1x256xf32, #tpu.memory_space<any>> -> memref<256xf32, #tpu.memory_space<any>>
    %c0_i32_23 = arith.constant 0 : i32
    %51 = tpu.memref_slice %arg4[%c5_i32_20, %c0_i32_23] : memref<16x256xf32, #tpu.memory_space<vmem>> -> memref<1x256xf32, #tpu.memory_space<vmem>>
    %52 = tpu.memref_squeeze %51 : memref<1x256xf32, #tpu.memory_space<vmem>> -> memref<256xf32, #tpu.memory_space<vmem>>
    %53 = tpu.memref_slice %arg5[%c5_i32_21] : memref<16x!tpu.dma_semaphore, #tpu.memory_space<semaphore_mem>> -> memref<1x!tpu.dma_semaphore, #tpu.memory_space<semaphore_mem>>
    %54 = tpu.memref_squeeze %53 : memref<1x!tpu.dma_semaphore, #tpu.memory_space<semaphore_mem>> -> memref<!tpu.dma_semaphore, #tpu.memory_space<semaphore_mem>>
    tpu.enqueue_dma source(%50 : memref<256xf32, #tpu.memory_space<any>>) target(%52 : memref<256xf32, #tpu.memory_space<vmem>>) target_semaphore(%54 : memref<!tpu.dma_semaphore, #tpu.memory_space<semaphore_mem>>)
    %c6_i32 = arith.constant 6 : i32
    %55 = arith.addi %0, %c6_i32 : i32
    %56 = arith.index_cast %55 : i32 to index
    %57 = memref.load %arg1[%56] : memref<16xi32, #tpu.memory_space<smem>>
    %c6_i32_24 = arith.constant 6 : i32
    %c6_i32_25 = arith.constant 6 : i32
    %c0_i32_26 = arith.constant 0 : i32
    %58 = tpu.memref_slice %arg2[%57, %c0_i32_26] : memref<128x256xf32, #tpu.memory_space<any>> -> memref<1x256xf32, #tpu.memory_space<any>>
    %59 = tpu.memref_squeeze %58 : memref<1x256xf32, #tpu.memory_space<any>> -> memref<256xf32, #tpu.memory_space<any>>
    %c0_i32_27 = arith.constant 0 : i32
    %60 = tpu.memref_slice %arg4[%c6_i32_24, %c0_i32_27] : memref<16x256xf32, #tpu.memory_space<vmem>> -> memref<1x256xf32, #tpu.memory_space<vmem>>
    %61 = tpu.memref_squeeze %60 : memref<1x256xf32, #tpu.memory_space<vmem>> -> memref<256xf32, #tpu.memory_space<vmem>>
    %62 = tpu.memref_slice %arg5[%c6_i32_25] : memref<16x!tpu.dma_semaphore, #tpu.memory_space<semaphore_mem>> -> memref<1x!tpu.dma_semaphore, #tpu.memory_space<semaphore_mem>>
    %63 = tpu.memref_squeeze %62 : memref<1x!tpu.dma_semaphore, #tpu.memory_space<semaphore_mem>> -> memref<!tpu.dma_semaphore, #tpu.memory_space<semaphore_mem>>
    tpu.enqueue_dma source(%59 : memref<256xf32, #tpu.memory_space<any>>) target(%61 : memref<256xf32, #tpu.memory_space<vmem>>) target_semaphore(%63 : memref<!tpu.dma_semaphore, #tpu.memory_space<semaphore_mem>>)
    %c7_i32 = arith.constant 7 : i32
    %64 = arith.addi %0, %c7_i32 : i32
    %65 = arith.index_cast %64 : i32 to index
    %66 = memref.load %arg1[%65] : memref<16xi32, #tpu.memory_space<smem>>
    %c7_i32_28 = arith.constant 7 : i32
    %c7_i32_29 = arith.constant 7 : i32
    %c0_i32_30 = arith.constant 0 : i32
    %67 = tpu.memref_slice %arg2[%66, %c0_i32_30] : memref<128x256xf32, #tpu.memory_space<any>> -> memref<1x256xf32, #tpu.memory_space<any>>
    %68 = tpu.memref_squeeze %67 : memref<1x256xf32, #tpu.memory_space<any>> -> memref<256xf32, #tpu.memory_space<any>>
    %c0_i32_31 = arith.constant 0 : i32
    %69 = tpu.memref_slice %arg4[%c7_i32_28, %c0_i32_31] : memref<16x256xf32, #tpu.memory_space<vmem>> -> memref<1x256xf32, #tpu.memory_space<vmem>>
    %70 = tpu.memref_squeeze %69 : memref<1x256xf32, #tpu.memory_space<vmem>> -> memref<256xf32, #tpu.memory_space<vmem>>
    %71 = tpu.memref_slice %arg5[%c7_i32_29] : memref<16x!tpu.dma_semaphore, #tpu.memory_space<semaphore_mem>> -> memref<1x!tpu.dma_semaphore, #tpu.memory_space<semaphore_mem>>
    %72 = tpu.memref_squeeze %71 : memref<1x!tpu.dma_semaphore, #tpu.memory_space<semaphore_mem>> -> memref<!tpu.dma_semaphore, #tpu.memory_space<semaphore_mem>>
    tpu.enqueue_dma source(%68 : memref<256xf32, #tpu.memory_space<any>>) target(%70 : memref<256xf32, #tpu.memory_space<vmem>>) target_semaphore(%72 : memref<!tpu.dma_semaphore, #tpu.memory_space<semaphore_mem>>)
    %c8_i32 = arith.constant 8 : i32
    %73 = arith.addi %0, %c8_i32 : i32
    %74 = arith.index_cast %73 : i32 to index
    %75 = memref.load %arg1[%74] : memref<16xi32, #tpu.memory_space<smem>>
    %c8_i32_32 = arith.constant 8 : i32
    %c8_i32_33 = arith.constant 8 : i32
    %c0_i32_34 = arith.constant 0 : i32
    %76 = tpu.memref_slice %arg2[%75, %c0_i32_34] : memref<128x256xf32, #tpu.memory_space<any>> -> memref<1x256xf32, #tpu.memory_space<any>>
    %77 = tpu.memref_squeeze %76 : memref<1x256xf32, #tpu.memory_space<any>> -> memref<256xf32, #tpu.memory_space<any>>
    %c0_i32_35 = arith.constant 0 : i32
    %78 = tpu.memref_slice %arg4[%c8_i32_32, %c0_i32_35] : memref<16x256xf32, #tpu.memory_space<vmem>> -> memref<1x256xf32, #tpu.memory_space<vmem>>
    %79 = tpu.memref_squeeze %78 : memref<1x256xf32, #tpu.memory_space<vmem>> -> memref<256xf32, #tpu.memory_space<vmem>>
    %80 = tpu.memref_slice %arg5[%c8_i32_33] : memref<16x!tpu.dma_semaphore, #tpu.memory_space<semaphore_mem>> -> memref<1x!tpu.dma_semaphore, #tpu.memory_space<semaphore_mem>>
    %81 = tpu.memref_squeeze %80 : memref<1x!tpu.dma_semaphore, #tpu.memory_space<semaphore_mem>> -> memref<!tpu.dma_semaphore, #tpu.memory_space<semaphore_mem>>
    tpu.enqueue_dma source(%77 : memref<256xf32, #tpu.memory_space<any>>) target(%79 : memref<256xf32, #tpu.memory_space<vmem>>) target_semaphore(%81 : memref<!tpu.dma_semaphore, #tpu.memory_space<semaphore_mem>>)
    %c9_i32 = arith.constant 9 : i32
    %82 = arith.addi %0, %c9_i32 : i32
    %83 = arith.index_cast %82 : i32 to index
    %84 = memref.load %arg1[%83] : memref<16xi32, #tpu.memory_space<smem>>
    %c9_i32_36 = arith.constant 9 : i32
    %c9_i32_37 = arith.constant 9 : i32
    %c0_i32_38 = arith.constant 0 : i32
    %85 = tpu.memref_slice %arg2[%84, %c0_i32_38] : memref<128x256xf32, #tpu.memory_space<any>> -> memref<1x256xf32, #tpu.memory_space<any>>
    %86 = tpu.memref_squeeze %85 : memref<1x256xf32, #tpu.memory_space<any>> -> memref<256xf32, #tpu.memory_space<any>>
    %c0_i32_39 = arith.constant 0 : i32
    %87 = tpu.memref_slice %arg4[%c9_i32_36, %c0_i32_39] : memref<16x256xf32, #tpu.memory_space<vmem>> -> memref<1x256xf32, #tpu.memory_space<vmem>>
    %88 = tpu.memref_squeeze %87 : memref<1x256xf32, #tpu.memory_space<vmem>> -> memref<256xf32, #tpu.memory_space<vmem>>
    %89 = tpu.memref_slice %arg5[%c9_i32_37] : memref<16x!tpu.dma_semaphore, #tpu.memory_space<semaphore_mem>> -> memref<1x!tpu.dma_semaphore, #tpu.memory_space<semaphore_mem>>
    %90 = tpu.memref_squeeze %89 : memref<1x!tpu.dma_semaphore, #tpu.memory_space<semaphore_mem>> -> memref<!tpu.dma_semaphore, #tpu.memory_space<semaphore_mem>>
    tpu.enqueue_dma source(%86 : memref<256xf32, #tpu.memory_space<any>>) target(%88 : memref<256xf32, #tpu.memory_space<vmem>>) target_semaphore(%90 : memref<!tpu.dma_semaphore, #tpu.memory_space<semaphore_mem>>)
    %c10_i32 = arith.constant 10 : i32
    %91 = arith.addi %0, %c10_i32 : i32
    %92 = arith.index_cast %91 : i32 to index
    %93 = memref.load %arg1[%92] : memref<16xi32, #tpu.memory_space<smem>>
    %c10_i32_40 = arith.constant 10 : i32
    %c10_i32_41 = arith.constant 10 : i32
    %c0_i32_42 = arith.constant 0 : i32
    %94 = tpu.memref_slice %arg2[%93, %c0_i32_42] : memref<128x256xf32, #tpu.memory_space<any>> -> memref<1x256xf32, #tpu.memory_space<any>>
    %95 = tpu.memref_squeeze %94 : memref<1x256xf32, #tpu.memory_space<any>> -> memref<256xf32, #tpu.memory_space<any>>
    %c0_i32_43 = arith.constant 0 : i32
    %96 = tpu.memref_slice %arg4[%c10_i32_40, %c0_i32_43] : memref<16x256xf32, #tpu.memory_space<vmem>> -> memref<1x256xf32, #tpu.memory_space<vmem>>
    %97 = tpu.memref_squeeze %96 : memref<1x256xf32, #tpu.memory_space<vmem>> -> memref<256xf32, #tpu.memory_space<vmem>>
    %98 = tpu.memref_slice %arg5[%c10_i32_41] : memref<16x!tpu.dma_semaphore, #tpu.memory_space<semaphore_mem>> -> memref<1x!tpu.dma_semaphore, #tpu.memory_space<semaphore_mem>>
    %99 = tpu.memref_squeeze %98 : memref<1x!tpu.dma_semaphore, #tpu.memory_space<semaphore_mem>> -> memref<!tpu.dma_semaphore, #tpu.memory_space<semaphore_mem>>
    tpu.enqueue_dma source(%95 : memref<256xf32, #tpu.memory_space<any>>) target(%97 : memref<256xf32, #tpu.memory_space<vmem>>) target_semaphore(%99 : memref<!tpu.dma_semaphore, #tpu.memory_space<semaphore_mem>>)
    %c11_i32 = arith.constant 11 : i32
    %100 = arith.addi %0, %c11_i32 : i32
    %101 = arith.index_cast %100 : i32 to index
    %102 = memref.load %arg1[%101] : memref<16xi32, #tpu.memory_space<smem>>
    %c11_i32_44 = arith.constant 11 : i32
    %c11_i32_45 = arith.constant 11 : i32
    %c0_i32_46 = arith.constant 0 : i32
    %103 = tpu.memref_slice %arg2[%102, %c0_i32_46] : memref<128x256xf32, #tpu.memory_space<any>> -> memref<1x256xf32, #tpu.memory_space<any>>
    %104 = tpu.memref_squeeze %103 : memref<1x256xf32, #tpu.memory_space<any>> -> memref<256xf32, #tpu.memory_space<any>>
    %c0_i32_47 = arith.constant 0 : i32
    %105 = tpu.memref_slice %arg4[%c11_i32_44, %c0_i32_47] : memref<16x256xf32, #tpu.memory_space<vmem>> -> memref<1x256xf32, #tpu.memory_space<vmem>>
    %106 = tpu.memref_squeeze %105 : memref<1x256xf32, #tpu.memory_space<vmem>> -> memref<256xf32, #tpu.memory_space<vmem>>
    %107 = tpu.memref_slice %arg5[%c11_i32_45] : memref<16x!tpu.dma_semaphore, #tpu.memory_space<semaphore_mem>> -> memref<1x!tpu.dma_semaphore, #tpu.memory_space<semaphore_mem>>
    %108 = tpu.memref_squeeze %107 : memref<1x!tpu.dma_semaphore, #tpu.memory_space<semaphore_mem>> -> memref<!tpu.dma_semaphore, #tpu.memory_space<semaphore_mem>>
    tpu.enqueue_dma source(%104 : memref<256xf32, #tpu.memory_space<any>>) target(%106 : memref<256xf32, #tpu.memory_space<vmem>>) target_semaphore(%108 : memref<!tpu.dma_semaphore, #tpu.memory_space<semaphore_mem>>)
    %c12_i32 = arith.constant 12 : i32
    %109 = arith.addi %0, %c12_i32 : i32
    %110 = arith.index_cast %109 : i32 to index
    %111 = memref.load %arg1[%110] : memref<16xi32, #tpu.memory_space<smem>>
    %c12_i32_48 = arith.constant 12 : i32
    %c12_i32_49 = arith.constant 12 : i32
    %c0_i32_50 = arith.constant 0 : i32
    %112 = tpu.memref_slice %arg2[%111, %c0_i32_50] : memref<128x256xf32, #tpu.memory_space<any>> -> memref<1x256xf32, #tpu.memory_space<any>>
    %113 = tpu.memref_squeeze %112 : memref<1x256xf32, #tpu.memory_space<any>> -> memref<256xf32, #tpu.memory_space<any>>
    %c0_i32_51 = arith.constant 0 : i32
    %114 = tpu.memref_slice %arg4[%c12_i32_48, %c0_i32_51] : memref<16x256xf32, #tpu.memory_space<vmem>> -> memref<1x256xf32, #tpu.memory_space<vmem>>
    %115 = tpu.memref_squeeze %114 : memref<1x256xf32, #tpu.memory_space<vmem>> -> memref<256xf32, #tpu.memory_space<vmem>>
    %116 = tpu.memref_slice %arg5[%c12_i32_49] : memref<16x!tpu.dma_semaphore, #tpu.memory_space<semaphore_mem>> -> memref<1x!tpu.dma_semaphore, #tpu.memory_space<semaphore_mem>>
    %117 = tpu.memref_squeeze %116 : memref<1x!tpu.dma_semaphore, #tpu.memory_space<semaphore_mem>> -> memref<!tpu.dma_semaphore, #tpu.memory_space<semaphore_mem>>
    tpu.enqueue_dma source(%113 : memref<256xf32, #tpu.memory_space<any>>) target(%115 : memref<256xf32, #tpu.memory_space<vmem>>) target_semaphore(%117 : memref<!tpu.dma_semaphore, #tpu.memory_space<semaphore_mem>>)
    %c13_i32 = arith.constant 13 : i32
    %118 = arith.addi %0, %c13_i32 : i32
    %119 = arith.index_cast %118 : i32 to index
    %120 = memref.load %arg1[%119] : memref<16xi32, #tpu.memory_space<smem>>
    %c13_i32_52 = arith.constant 13 : i32
    %c13_i32_53 = arith.constant 13 : i32
    %c0_i32_54 = arith.constant 0 : i32
    %121 = tpu.memref_slice %arg2[%120, %c0_i32_54] : memref<128x256xf32, #tpu.memory_space<any>> -> memref<1x256xf32, #tpu.memory_space<any>>
    %122 = tpu.memref_squeeze %121 : memref<1x256xf32, #tpu.memory_space<any>> -> memref<256xf32, #tpu.memory_space<any>>
    %c0_i32_55 = arith.constant 0 : i32
    %123 = tpu.memref_slice %arg4[%c13_i32_52, %c0_i32_55] : memref<16x256xf32, #tpu.memory_space<vmem>> -> memref<1x256xf32, #tpu.memory_space<vmem>>
    %124 = tpu.memref_squeeze %123 : memref<1x256xf32, #tpu.memory_space<vmem>> -> memref<256xf32, #tpu.memory_space<vmem>>
    %125 = tpu.memref_slice %arg5[%c13_i32_53] : memref<16x!tpu.dma_semaphore, #tpu.memory_space<semaphore_mem>> -> memref<1x!tpu.dma_semaphore, #tpu.memory_space<semaphore_mem>>
    %126 = tpu.memref_squeeze %125 : memref<1x!tpu.dma_semaphore, #tpu.memory_space<semaphore_mem>> -> memref<!tpu.dma_semaphore, #tpu.memory_space<semaphore_mem>>
    tpu.enqueue_dma source(%122 : memref<256xf32, #tpu.memory_space<any>>) target(%124 : memref<256xf32, #tpu.memory_space<vmem>>) target_semaphore(%126 : memref<!tpu.dma_semaphore, #tpu.memory_space<semaphore_mem>>)
    %c14_i32 = arith.constant 14 : i32
    %127 = arith.addi %0, %c14_i32 : i32
    %128 = arith.index_cast %127 : i32 to index
    %129 = memref.load %arg1[%128] : memref<16xi32, #tpu.memory_space<smem>>
    %c14_i32_56 = arith.constant 14 : i32
    %c14_i32_57 = arith.constant 14 : i32
    %c0_i32_58 = arith.constant 0 : i32
    %130 = tpu.memref_slice %arg2[%129, %c0_i32_58] : memref<128x256xf32, #tpu.memory_space<any>> -> memref<1x256xf32, #tpu.memory_space<any>>
    %131 = tpu.memref_squeeze %130 : memref<1x256xf32, #tpu.memory_space<any>> -> memref<256xf32, #tpu.memory_space<any>>
    %c0_i32_59 = arith.constant 0 : i32
    %132 = tpu.memref_slice %arg4[%c14_i32_56, %c0_i32_59] : memref<16x256xf32, #tpu.memory_space<vmem>> -> memref<1x256xf32, #tpu.memory_space<vmem>>
    %133 = tpu.memref_squeeze %132 : memref<1x256xf32, #tpu.memory_space<vmem>> -> memref<256xf32, #tpu.memory_space<vmem>>
    %134 = tpu.memref_slice %arg5[%c14_i32_57] : memref<16x!tpu.dma_semaphore, #tpu.memory_space<semaphore_mem>> -> memref<1x!tpu.dma_semaphore, #tpu.memory_space<semaphore_mem>>
    %135 = tpu.memref_squeeze %134 : memref<1x!tpu.dma_semaphore, #tpu.memory_space<semaphore_mem>> -> memref<!tpu.dma_semaphore, #tpu.memory_space<semaphore_mem>>
    tpu.enqueue_dma source(%131 : memref<256xf32, #tpu.memory_space<any>>) target(%133 : memref<256xf32, #tpu.memory_space<vmem>>) target_semaphore(%135 : memref<!tpu.dma_semaphore, #tpu.memory_space<semaphore_mem>>)
    %c15_i32 = arith.constant 15 : i32
    %136 = arith.addi %0, %c15_i32 : i32
    %137 = arith.index_cast %136 : i32 to index
    %138 = memref.load %arg1[%137] : memref<16xi32, #tpu.memory_space<smem>>
    %c15_i32_60 = arith.constant 15 : i32
    %c15_i32_61 = arith.constant 15 : i32
    %c0_i32_62 = arith.constant 0 : i32
    %139 = tpu.memref_slice %arg2[%138, %c0_i32_62] : memref<128x256xf32, #tpu.memory_space<any>> -> memref<1x256xf32, #tpu.memory_space<any>>
    %140 = tpu.memref_squeeze %139 : memref<1x256xf32, #tpu.memory_space<any>> -> memref<256xf32, #tpu.memory_space<any>>
    %c0_i32_63 = arith.constant 0 : i32
    %141 = tpu.memref_slice %arg4[%c15_i32_60, %c0_i32_63] : memref<16x256xf32, #tpu.memory_space<vmem>> -> memref<1x256xf32, #tpu.memory_space<vmem>>
    %142 = tpu.memref_squeeze %141 : memref<1x256xf32, #tpu.memory_space<vmem>> -> memref<256xf32, #tpu.memory_space<vmem>>
    %143 = tpu.memref_slice %arg5[%c15_i32_61] : memref<16x!tpu.dma_semaphore, #tpu.memory_space<semaphore_mem>> -> memref<1x!tpu.dma_semaphore, #tpu.memory_space<semaphore_mem>>
    %144 = tpu.memref_squeeze %143 : memref<1x!tpu.dma_semaphore, #tpu.memory_space<semaphore_mem>> -> memref<!tpu.dma_semaphore, #tpu.memory_space<semaphore_mem>>
    tpu.enqueue_dma source(%140 : memref<256xf32, #tpu.memory_space<any>>) target(%142 : memref<256xf32, #tpu.memory_space<vmem>>) target_semaphore(%144 : memref<!tpu.dma_semaphore, #tpu.memory_space<semaphore_mem>>)
    %c0_i32_64 = arith.constant 0 : i32
    %c0_i32_65 = arith.constant 0 : i32
    %c0_i32_66 = arith.constant 0 : i32
    %c0_i32_67 = arith.constant 0 : i32
    %145 = tpu.memref_slice %arg2[%c0_i32_64, %c0_i32_67] : memref<128x256xf32, #tpu.memory_space<any>> -> memref<1x256xf32, #tpu.memory_space<any>>
    %146 = tpu.memref_squeeze %145 : memref<1x256xf32, #tpu.memory_space<any>> -> memref<256xf32, #tpu.memory_space<any>>
    %c0_i32_68 = arith.constant 0 : i32
    %147 = tpu.memref_slice %arg4[%c0_i32_65, %c0_i32_68] : memref<16x256xf32, #tpu.memory_space<vmem>> -> memref<1x256xf32, #tpu.memory_space<vmem>>
    %148 = tpu.memref_squeeze %147 : memref<1x256xf32, #tpu.memory_space<vmem>> -> memref<256xf32, #tpu.memory_space<vmem>>
    %149 = tpu.memref_slice %arg5[%c0_i32_66] : memref<16x!tpu.dma_semaphore, #tpu.memory_space<semaphore_mem>> -> memref<1x!tpu.dma_semaphore, #tpu.memory_space<semaphore_mem>>
    %150 = tpu.memref_squeeze %149 : memref<1x!tpu.dma_semaphore, #tpu.memory_space<semaphore_mem>> -> memref<!tpu.dma_semaphore, #tpu.memory_space<semaphore_mem>>
    tpu.wait_dma2 semaphore(%150 : memref<!tpu.dma_semaphore, #tpu.memory_space<semaphore_mem>>) src(%146 : memref<256xf32, #tpu.memory_space<any>>) dst(%148 : memref<256xf32, #tpu.memory_space<vmem>>)
    %c0_i32_69 = arith.constant 0 : i32
    %c1_i32_70 = arith.constant 1 : i32
    %c1_i32_71 = arith.constant 1 : i32
    %c0_i32_72 = arith.constant 0 : i32
    %151 = tpu.memref_slice %arg2[%c0_i32_69, %c0_i32_72] : memref<128x256xf32, #tpu.memory_space<any>> -> memref<1x256xf32, #tpu.memory_space<any>>
    %152 = tpu.memref_squeeze %151 : memref<1x256xf32, #tpu.memory_space<any>> -> memref<256xf32, #tpu.memory_space<any>>
    %c0_i32_73 = arith.constant 0 : i32
    %153 = tpu.memref_slice %arg4[%c1_i32_70, %c0_i32_73] : memref<16x256xf32, #tpu.memory_space<vmem>> -> memref<1x256xf32, #tpu.memory_space<vmem>>
    %154 = tpu.memref_squeeze %153 : memref<1x256xf32, #tpu.memory_space<vmem>> -> memref<256xf32, #tpu.memory_space<vmem>>
    %155 = tpu.memref_slice %arg5[%c1_i32_71] : memref<16x!tpu.dma_semaphore, #tpu.memory_space<semaphore_mem>> -> memref<1x!tpu.dma_semaphore, #tpu.memory_space<semaphore_mem>>
    %156 = tpu.memref_squeeze %155 : memref<1x!tpu.dma_semaphore, #tpu.memory_space<semaphore_mem>> -> memref<!tpu.dma_semaphore, #tpu.memory_space<semaphore_mem>>
    tpu.wait_dma2 semaphore(%156 : memref<!tpu.dma_semaphore, #tpu.memory_space<semaphore_mem>>) src(%152 : memref<256xf32, #tpu.memory_space<any>>) dst(%154 : memref<256xf32, #tpu.memory_space<vmem>>)
    %c0_i32_74 = arith.constant 0 : i32
    %c2_i32_75 = arith.constant 2 : i32
    %c2_i32_76 = arith.constant 2 : i32
    %c0_i32_77 = arith.constant 0 : i32
    %157 = tpu.memref_slice %arg2[%c0_i32_74, %c0_i32_77] : memref<128x256xf32, #tpu.memory_space<any>> -> memref<1x256xf32, #tpu.memory_space<any>>
    %158 = tpu.memref_squeeze %157 : memref<1x256xf32, #tpu.memory_space<any>> -> memref<256xf32, #tpu.memory_space<any>>
    %c0_i32_78 = arith.constant 0 : i32
    %159 = tpu.memref_slice %arg4[%c2_i32_75, %c0_i32_78] : memref<16x256xf32, #tpu.memory_space<vmem>> -> memref<1x256xf32, #tpu.memory_space<vmem>>
    %160 = tpu.memref_squeeze %159 : memref<1x256xf32, #tpu.memory_space<vmem>> -> memref<256xf32, #tpu.memory_space<vmem>>
    %161 = tpu.memref_slice %arg5[%c2_i32_76] : memref<16x!tpu.dma_semaphore, #tpu.memory_space<semaphore_mem>> -> memref<1x!tpu.dma_semaphore, #tpu.memory_space<semaphore_mem>>
    %162 = tpu.memref_squeeze %161 : memref<1x!tpu.dma_semaphore, #tpu.memory_space<semaphore_mem>> -> memref<!tpu.dma_semaphore, #tpu.memory_space<semaphore_mem>>
    tpu.wait_dma2 semaphore(%162 : memref<!tpu.dma_semaphore, #tpu.memory_space<semaphore_mem>>) src(%158 : memref<256xf32, #tpu.memory_space<any>>) dst(%160 : memref<256xf32, #tpu.memory_space<vmem>>)
    %c0_i32_79 = arith.constant 0 : i32
    %c3_i32_80 = arith.constant 3 : i32
    %c3_i32_81 = arith.constant 3 : i32
    %c0_i32_82 = arith.constant 0 : i32
    %163 = tpu.memref_slice %arg2[%c0_i32_79, %c0_i32_82] : memref<128x256xf32, #tpu.memory_space<any>> -> memref<1x256xf32, #tpu.memory_space<any>>
    %164 = tpu.memref_squeeze %163 : memref<1x256xf32, #tpu.memory_space<any>> -> memref<256xf32, #tpu.memory_space<any>>
    %c0_i32_83 = arith.constant 0 : i32
    %165 = tpu.memref_slice %arg4[%c3_i32_80, %c0_i32_83] : memref<16x256xf32, #tpu.memory_space<vmem>> -> memref<1x256xf32, #tpu.memory_space<vmem>>
    %166 = tpu.memref_squeeze %165 : memref<1x256xf32, #tpu.memory_space<vmem>> -> memref<256xf32, #tpu.memory_space<vmem>>
    %167 = tpu.memref_slice %arg5[%c3_i32_81] : memref<16x!tpu.dma_semaphore, #tpu.memory_space<semaphore_mem>> -> memref<1x!tpu.dma_semaphore, #tpu.memory_space<semaphore_mem>>
    %168 = tpu.memref_squeeze %167 : memref<1x!tpu.dma_semaphore, #tpu.memory_space<semaphore_mem>> -> memref<!tpu.dma_semaphore, #tpu.memory_space<semaphore_mem>>
    tpu.wait_dma2 semaphore(%168 : memref<!tpu.dma_semaphore, #tpu.memory_space<semaphore_mem>>) src(%164 : memref<256xf32, #tpu.memory_space<any>>) dst(%166 : memref<256xf32, #tpu.memory_space<vmem>>)
    %c0_i32_84 = arith.constant 0 : i32
    %c4_i32_85 = arith.constant 4 : i32
    %c4_i32_86 = arith.constant 4 : i32
    %c0_i32_87 = arith.constant 0 : i32
    %169 = tpu.memref_slice %arg2[%c0_i32_84, %c0_i32_87] : memref<128x256xf32, #tpu.memory_space<any>> -> memref<1x256xf32, #tpu.memory_space<any>>
    %170 = tpu.memref_squeeze %169 : memref<1x256xf32, #tpu.memory_space<any>> -> memref<256xf32, #tpu.memory_space<any>>
    %c0_i32_88 = arith.constant 0 : i32
    %171 = tpu.memref_slice %arg4[%c4_i32_85, %c0_i32_88] : memref<16x256xf32, #tpu.memory_space<vmem>> -> memref<1x256xf32, #tpu.memory_space<vmem>>
    %172 = tpu.memref_squeeze %171 : memref<1x256xf32, #tpu.memory_space<vmem>> -> memref<256xf32, #tpu.memory_space<vmem>>
    %173 = tpu.memref_slice %arg5[%c4_i32_86] : memref<16x!tpu.dma_semaphore, #tpu.memory_space<semaphore_mem>> -> memref<1x!tpu.dma_semaphore, #tpu.memory_space<semaphore_mem>>
    %174 = tpu.memref_squeeze %173 : memref<1x!tpu.dma_semaphore, #tpu.memory_space<semaphore_mem>> -> memref<!tpu.dma_semaphore, #tpu.memory_space<semaphore_mem>>
    tpu.wait_dma2 semaphore(%174 : memref<!tpu.dma_semaphore, #tpu.memory_space<semaphore_mem>>) src(%170 : memref<256xf32, #tpu.memory_space<any>>) dst(%172 : memref<256xf32, #tpu.memory_space<vmem>>)
    %c0_i32_89 = arith.constant 0 : i32
    %c5_i32_90 = arith.constant 5 : i32
    %c5_i32_91 = arith.constant 5 : i32
    %c0_i32_92 = arith.constant 0 : i32
    %175 = tpu.memref_slice %arg2[%c0_i32_89, %c0_i32_92] : memref<128x256xf32, #tpu.memory_space<any>> -> memref<1x256xf32, #tpu.memory_space<any>>
    %176 = tpu.memref_squeeze %175 : memref<1x256xf32, #tpu.memory_space<any>> -> memref<256xf32, #tpu.memory_space<any>>
    %c0_i32_93 = arith.constant 0 : i32
    %177 = tpu.memref_slice %arg4[%c5_i32_90, %c0_i32_93] : memref<16x256xf32, #tpu.memory_space<vmem>> -> memref<1x256xf32, #tpu.memory_space<vmem>>
    %178 = tpu.memref_squeeze %177 : memref<1x256xf32, #tpu.memory_space<vmem>> -> memref<256xf32, #tpu.memory_space<vmem>>
    %179 = tpu.memref_slice %arg5[%c5_i32_91] : memref<16x!tpu.dma_semaphore, #tpu.memory_space<semaphore_mem>> -> memref<1x!tpu.dma_semaphore, #tpu.memory_space<semaphore_mem>>
    %180 = tpu.memref_squeeze %179 : memref<1x!tpu.dma_semaphore, #tpu.memory_space<semaphore_mem>> -> memref<!tpu.dma_semaphore, #tpu.memory_space<semaphore_mem>>
    tpu.wait_dma2 semaphore(%180 : memref<!tpu.dma_semaphore, #tpu.memory_space<semaphore_mem>>) src(%176 : memref<256xf32, #tpu.memory_space<any>>) dst(%178 : memref<256xf32, #tpu.memory_space<vmem>>)
    %c0_i32_94 = arith.constant 0 : i32
    %c6_i32_95 = arith.constant 6 : i32
    %c6_i32_96 = arith.constant 6 : i32
    %c0_i32_97 = arith.constant 0 : i32
    %181 = tpu.memref_slice %arg2[%c0_i32_94, %c0_i32_97] : memref<128x256xf32, #tpu.memory_space<any>> -> memref<1x256xf32, #tpu.memory_space<any>>
    %182 = tpu.memref_squeeze %181 : memref<1x256xf32, #tpu.memory_space<any>> -> memref<256xf32, #tpu.memory_space<any>>
    %c0_i32_98 = arith.constant 0 : i32
    %183 = tpu.memref_slice %arg4[%c6_i32_95, %c0_i32_98] : memref<16x256xf32, #tpu.memory_space<vmem>> -> memref<1x256xf32, #tpu.memory_space<vmem>>
    %184 = tpu.memref_squeeze %183 : memref<1x256xf32, #tpu.memory_space<vmem>> -> memref<256xf32, #tpu.memory_space<vmem>>
    %185 = tpu.memref_slice %arg5[%c6_i32_96] : memref<16x!tpu.dma_semaphore, #tpu.memory_space<semaphore_mem>> -> memref<1x!tpu.dma_semaphore, #tpu.memory_space<semaphore_mem>>
    %186 = tpu.memref_squeeze %185 : memref<1x!tpu.dma_semaphore, #tpu.memory_space<semaphore_mem>> -> memref<!tpu.dma_semaphore, #tpu.memory_space<semaphore_mem>>
    tpu.wait_dma2 semaphore(%186 : memref<!tpu.dma_semaphore, #tpu.memory_space<semaphore_mem>>) src(%182 : memref<256xf32, #tpu.memory_space<any>>) dst(%184 : memref<256xf32, #tpu.memory_space<vmem>>)
    %c0_i32_99 = arith.constant 0 : i32
    %c7_i32_100 = arith.constant 7 : i32
    %c7_i32_101 = arith.constant 7 : i32
    %c0_i32_102 = arith.constant 0 : i32
    %187 = tpu.memref_slice %arg2[%c0_i32_99, %c0_i32_102] : memref<128x256xf32, #tpu.memory_space<any>> -> memref<1x256xf32, #tpu.memory_space<any>>
    %188 = tpu.memref_squeeze %187 : memref<1x256xf32, #tpu.memory_space<any>> -> memref<256xf32, #tpu.memory_space<any>>
    %c0_i32_103 = arith.constant 0 : i32
    %189 = tpu.memref_slice %arg4[%c7_i32_100, %c0_i32_103] : memref<16x256xf32, #tpu.memory_space<vmem>> -> memref<1x256xf32, #tpu.memory_space<vmem>>
    %190 = tpu.memref_squeeze %189 : memref<1x256xf32, #tpu.memory_space<vmem>> -> memref<256xf32, #tpu.memory_space<vmem>>
    %191 = tpu.memref_slice %arg5[%c7_i32_101] : memref<16x!tpu.dma_semaphore, #tpu.memory_space<semaphore_mem>> -> memref<1x!tpu.dma_semaphore, #tpu.memory_space<semaphore_mem>>
    %192 = tpu.memref_squeeze %191 : memref<1x!tpu.dma_semaphore, #tpu.memory_space<semaphore_mem>> -> memref<!tpu.dma_semaphore, #tpu.memory_space<semaphore_mem>>
    tpu.wait_dma2 semaphore(%192 : memref<!tpu.dma_semaphore, #tpu.memory_space<semaphore_mem>>) src(%188 : memref<256xf32, #tpu.memory_space<any>>) dst(%190 : memref<256xf32, #tpu.memory_space<vmem>>)
    %c0_i32_104 = arith.constant 0 : i32
    %c8_i32_105 = arith.constant 8 : i32
    %c8_i32_106 = arith.constant 8 : i32
    %c0_i32_107 = arith.constant 0 : i32
    %193 = tpu.memref_slice %arg2[%c0_i32_104, %c0_i32_107] : memref<128x256xf32, #tpu.memory_space<any>> -> memref<1x256xf32, #tpu.memory_space<any>>
    %194 = tpu.memref_squeeze %193 : memref<1x256xf32, #tpu.memory_space<any>> -> memref<256xf32, #tpu.memory_space<any>>
    %c0_i32_108 = arith.constant 0 : i32
    %195 = tpu.memref_slice %arg4[%c8_i32_105, %c0_i32_108] : memref<16x256xf32, #tpu.memory_space<vmem>> -> memref<1x256xf32, #tpu.memory_space<vmem>>
    %196 = tpu.memref_squeeze %195 : memref<1x256xf32, #tpu.memory_space<vmem>> -> memref<256xf32, #tpu.memory_space<vmem>>
    %197 = tpu.memref_slice %arg5[%c8_i32_106] : memref<16x!tpu.dma_semaphore, #tpu.memory_space<semaphore_mem>> -> memref<1x!tpu.dma_semaphore, #tpu.memory_space<semaphore_mem>>
    %198 = tpu.memref_squeeze %197 : memref<1x!tpu.dma_semaphore, #tpu.memory_space<semaphore_mem>> -> memref<!tpu.dma_semaphore, #tpu.memory_space<semaphore_mem>>
    tpu.wait_dma2 semaphore(%198 : memref<!tpu.dma_semaphore, #tpu.memory_space<semaphore_mem>>) src(%194 : memref<256xf32, #tpu.memory_space<any>>) dst(%196 : memref<256xf32, #tpu.memory_space<vmem>>)
    %c0_i32_109 = arith.constant 0 : i32
    %c9_i32_110 = arith.constant 9 : i32
    %c9_i32_111 = arith.constant 9 : i32
    %c0_i32_112 = arith.constant 0 : i32
    %199 = tpu.memref_slice %arg2[%c0_i32_109, %c0_i32_112] : memref<128x256xf32, #tpu.memory_space<any>> -> memref<1x256xf32, #tpu.memory_space<any>>
    %200 = tpu.memref_squeeze %199 : memref<1x256xf32, #tpu.memory_space<any>> -> memref<256xf32, #tpu.memory_space<any>>
    %c0_i32_113 = arith.constant 0 : i32
    %201 = tpu.memref_slice %arg4[%c9_i32_110, %c0_i32_113] : memref<16x256xf32, #tpu.memory_space<vmem>> -> memref<1x256xf32, #tpu.memory_space<vmem>>
    %202 = tpu.memref_squeeze %201 : memref<1x256xf32, #tpu.memory_space<vmem>> -> memref<256xf32, #tpu.memory_space<vmem>>
    %203 = tpu.memref_slice %arg5[%c9_i32_111] : memref<16x!tpu.dma_semaphore, #tpu.memory_space<semaphore_mem>> -> memref<1x!tpu.dma_semaphore, #tpu.memory_space<semaphore_mem>>
    %204 = tpu.memref_squeeze %203 : memref<1x!tpu.dma_semaphore, #tpu.memory_space<semaphore_mem>> -> memref<!tpu.dma_semaphore, #tpu.memory_space<semaphore_mem>>
    tpu.wait_dma2 semaphore(%204 : memref<!tpu.dma_semaphore, #tpu.memory_space<semaphore_mem>>) src(%200 : memref<256xf32, #tpu.memory_space<any>>) dst(%202 : memref<256xf32, #tpu.memory_space<vmem>>)
    %c0_i32_114 = arith.constant 0 : i32
    %c10_i32_115 = arith.constant 10 : i32
    %c10_i32_116 = arith.constant 10 : i32
    %c0_i32_117 = arith.constant 0 : i32
    %205 = tpu.memref_slice %arg2[%c0_i32_114, %c0_i32_117] : memref<128x256xf32, #tpu.memory_space<any>> -> memref<1x256xf32, #tpu.memory_space<any>>
    %206 = tpu.memref_squeeze %205 : memref<1x256xf32, #tpu.memory_space<any>> -> memref<256xf32, #tpu.memory_space<any>>
    %c0_i32_118 = arith.constant 0 : i32
    %207 = tpu.memref_slice %arg4[%c10_i32_115, %c0_i32_118] : memref<16x256xf32, #tpu.memory_space<vmem>> -> memref<1x256xf32, #tpu.memory_space<vmem>>
    %208 = tpu.memref_squeeze %207 : memref<1x256xf32, #tpu.memory_space<vmem>> -> memref<256xf32, #tpu.memory_space<vmem>>
    %209 = tpu.memref_slice %arg5[%c10_i32_116] : memref<16x!tpu.dma_semaphore, #tpu.memory_space<semaphore_mem>> -> memref<1x!tpu.dma_semaphore, #tpu.memory_space<semaphore_mem>>
    %210 = tpu.memref_squeeze %209 : memref<1x!tpu.dma_semaphore, #tpu.memory_space<semaphore_mem>> -> memref<!tpu.dma_semaphore, #tpu.memory_space<semaphore_mem>>
    tpu.wait_dma2 semaphore(%210 : memref<!tpu.dma_semaphore, #tpu.memory_space<semaphore_mem>>) src(%206 : memref<256xf32, #tpu.memory_space<any>>) dst(%208 : memref<256xf32, #tpu.memory_space<vmem>>)
    %c0_i32_119 = arith.constant 0 : i32
    %c11_i32_120 = arith.constant 11 : i32
    %c11_i32_121 = arith.constant 11 : i32
    %c0_i32_122 = arith.constant 0 : i32
    %211 = tpu.memref_slice %arg2[%c0_i32_119, %c0_i32_122] : memref<128x256xf32, #tpu.memory_space<any>> -> memref<1x256xf32, #tpu.memory_space<any>>
    %212 = tpu.memref_squeeze %211 : memref<1x256xf32, #tpu.memory_space<any>> -> memref<256xf32, #tpu.memory_space<any>>
    %c0_i32_123 = arith.constant 0 : i32
    %213 = tpu.memref_slice %arg4[%c11_i32_120, %c0_i32_123] : memref<16x256xf32, #tpu.memory_space<vmem>> -> memref<1x256xf32, #tpu.memory_space<vmem>>
    %214 = tpu.memref_squeeze %213 : memref<1x256xf32, #tpu.memory_space<vmem>> -> memref<256xf32, #tpu.memory_space<vmem>>
    %215 = tpu.memref_slice %arg5[%c11_i32_121] : memref<16x!tpu.dma_semaphore, #tpu.memory_space<semaphore_mem>> -> memref<1x!tpu.dma_semaphore, #tpu.memory_space<semaphore_mem>>
    %216 = tpu.memref_squeeze %215 : memref<1x!tpu.dma_semaphore, #tpu.memory_space<semaphore_mem>> -> memref<!tpu.dma_semaphore, #tpu.memory_space<semaphore_mem>>
    tpu.wait_dma2 semaphore(%216 : memref<!tpu.dma_semaphore, #tpu.memory_space<semaphore_mem>>) src(%212 : memref<256xf32, #tpu.memory_space<any>>) dst(%214 : memref<256xf32, #tpu.memory_space<vmem>>)
    %c0_i32_124 = arith.constant 0 : i32
    %c12_i32_125 = arith.constant 12 : i32
    %c12_i32_126 = arith.constant 12 : i32
    %c0_i32_127 = arith.constant 0 : i32
    %217 = tpu.memref_slice %arg2[%c0_i32_124, %c0_i32_127] : memref<128x256xf32, #tpu.memory_space<any>> -> memref<1x256xf32, #tpu.memory_space<any>>
    %218 = tpu.memref_squeeze %217 : memref<1x256xf32, #tpu.memory_space<any>> -> memref<256xf32, #tpu.memory_space<any>>
    %c0_i32_128 = arith.constant 0 : i32
    %219 = tpu.memref_slice %arg4[%c12_i32_125, %c0_i32_128] : memref<16x256xf32, #tpu.memory_space<vmem>> -> memref<1x256xf32, #tpu.memory_space<vmem>>
    %220 = tpu.memref_squeeze %219 : memref<1x256xf32, #tpu.memory_space<vmem>> -> memref<256xf32, #tpu.memory_space<vmem>>
    %221 = tpu.memref_slice %arg5[%c12_i32_126] : memref<16x!tpu.dma_semaphore, #tpu.memory_space<semaphore_mem>> -> memref<1x!tpu.dma_semaphore, #tpu.memory_space<semaphore_mem>>
    %222 = tpu.memref_squeeze %221 : memref<1x!tpu.dma_semaphore, #tpu.memory_space<semaphore_mem>> -> memref<!tpu.dma_semaphore, #tpu.memory_space<semaphore_mem>>
    tpu.wait_dma2 semaphore(%222 : memref<!tpu.dma_semaphore, #tpu.memory_space<semaphore_mem>>) src(%218 : memref<256xf32, #tpu.memory_space<any>>) dst(%220 : memref<256xf32, #tpu.memory_space<vmem>>)
    %c0_i32_129 = arith.constant 0 : i32
    %c13_i32_130 = arith.constant 13 : i32
    %c13_i32_131 = arith.constant 13 : i32
    %c0_i32_132 = arith.constant 0 : i32
    %223 = tpu.memref_slice %arg2[%c0_i32_129, %c0_i32_132] : memref<128x256xf32, #tpu.memory_space<any>> -> memref<1x256xf32, #tpu.memory_space<any>>
    %224 = tpu.memref_squeeze %223 : memref<1x256xf32, #tpu.memory_space<any>> -> memref<256xf32, #tpu.memory_space<any>>
    %c0_i32_133 = arith.constant 0 : i32
    %225 = tpu.memref_slice %arg4[%c13_i32_130, %c0_i32_133] : memref<16x256xf32, #tpu.memory_space<vmem>> -> memref<1x256xf32, #tpu.memory_space<vmem>>
    %226 = tpu.memref_squeeze %225 : memref<1x256xf32, #tpu.memory_space<vmem>> -> memref<256xf32, #tpu.memory_space<vmem>>
    %227 = tpu.memref_slice %arg5[%c13_i32_131] : memref<16x!tpu.dma_semaphore, #tpu.memory_space<semaphore_mem>> -> memref<1x!tpu.dma_semaphore, #tpu.memory_space<semaphore_mem>>
    %228 = tpu.memref_squeeze %227 : memref<1x!tpu.dma_semaphore, #tpu.memory_space<semaphore_mem>> -> memref<!tpu.dma_semaphore, #tpu.memory_space<semaphore_mem>>
    tpu.wait_dma2 semaphore(%228 : memref<!tpu.dma_semaphore, #tpu.memory_space<semaphore_mem>>) src(%224 : memref<256xf32, #tpu.memory_space<any>>) dst(%226 : memref<256xf32, #tpu.memory_space<vmem>>)
    %c0_i32_134 = arith.constant 0 : i32
    %c14_i32_135 = arith.constant 14 : i32
    %c14_i32_136 = arith.constant 14 : i32
    %c0_i32_137 = arith.constant 0 : i32
    %229 = tpu.memref_slice %arg2[%c0_i32_134, %c0_i32_137] : memref<128x256xf32, #tpu.memory_space<any>> -> memref<1x256xf32, #tpu.memory_space<any>>
    %230 = tpu.memref_squeeze %229 : memref<1x256xf32, #tpu.memory_space<any>> -> memref<256xf32, #tpu.memory_space<any>>
    %c0_i32_138 = arith.constant 0 : i32
    %231 = tpu.memref_slice %arg4[%c14_i32_135, %c0_i32_138] : memref<16x256xf32, #tpu.memory_space<vmem>> -> memref<1x256xf32, #tpu.memory_space<vmem>>
    %232 = tpu.memref_squeeze %231 : memref<1x256xf32, #tpu.memory_space<vmem>> -> memref<256xf32, #tpu.memory_space<vmem>>
    %233 = tpu.memref_slice %arg5[%c14_i32_136] : memref<16x!tpu.dma_semaphore, #tpu.memory_space<semaphore_mem>> -> memref<1x!tpu.dma_semaphore, #tpu.memory_space<semaphore_mem>>
    %234 = tpu.memref_squeeze %233 : memref<1x!tpu.dma_semaphore, #tpu.memory_space<semaphore_mem>> -> memref<!tpu.dma_semaphore, #tpu.memory_space<semaphore_mem>>
    tpu.wait_dma2 semaphore(%234 : memref<!tpu.dma_semaphore, #tpu.memory_space<semaphore_mem>>) src(%230 : memref<256xf32, #tpu.memory_space<any>>) dst(%232 : memref<256xf32, #tpu.memory_space<vmem>>)
    %c0_i32_139 = arith.constant 0 : i32
    %c15_i32_140 = arith.constant 15 : i32
    %c15_i32_141 = arith.constant 15 : i32
    %c0_i32_142 = arith.constant 0 : i32
    %235 = tpu.memref_slice %arg2[%c0_i32_139, %c0_i32_142] : memref<128x256xf32, #tpu.memory_space<any>> -> memref<1x256xf32, #tpu.memory_space<any>>
    %236 = tpu.memref_squeeze %235 : memref<1x256xf32, #tpu.memory_space<any>> -> memref<256xf32, #tpu.memory_space<any>>
    %c0_i32_143 = arith.constant 0 : i32
    %237 = tpu.memref_slice %arg4[%c15_i32_140, %c0_i32_143] : memref<16x256xf32, #tpu.memory_space<vmem>> -> memref<1x256xf32, #tpu.memory_space<vmem>>
    %238 = tpu.memref_squeeze %237 : memref<1x256xf32, #tpu.memory_space<vmem>> -> memref<256xf32, #tpu.memory_space<vmem>>
    %239 = tpu.memref_slice %arg5[%c15_i32_141] : memref<16x!tpu.dma_semaphore, #tpu.memory_space<semaphore_mem>> -> memref<1x!tpu.dma_semaphore, #tpu.memory_space<semaphore_mem>>
    %240 = tpu.memref_squeeze %239 : memref<1x!tpu.dma_semaphore, #tpu.memory_space<semaphore_mem>> -> memref<!tpu.dma_semaphore, #tpu.memory_space<semaphore_mem>>
    tpu.wait_dma2 semaphore(%240 : memref<!tpu.dma_semaphore, #tpu.memory_space<semaphore_mem>>) src(%236 : memref<256xf32, #tpu.memory_space<any>>) dst(%238 : memref<256xf32, #tpu.memory_space<vmem>>)
    %c0 = arith.constant 0 : index
    %c0_144 = arith.constant 0 : index
    %241 = vector.load %arg4[%c0, %c0_144] : memref<16x256xf32, #tpu.memory_space<vmem>>, vector<16x256xf32>
    %c0_145 = arith.constant 0 : index
    %c0_146 = arith.constant 0 : index
    %242 = vector.load %arg3[%c0_145, %c0_146] : memref<16x256xf32, #tpu.memory_space<vmem>>, vector<16x256xf32>
    tpu.vector_store %arg3[%c0_145, %c0_146], %241 {strides = array<i32>} : memref<16x256xf32, #tpu.memory_space<vmem>>, vector<16x256xf32>,
    return
  }
  func.func @transform_1(%arg0: i32, %arg1: memref<16xi32, #tpu.memory_space<smem>>) -> (i32, i32) {
    %c0_i32 = arith.constant 0 : i32
    %c0_i32_0 = arith.constant 0 : i32
    return %arg0, %c0_i32 : i32, i32
  }
}

</mosaic_0001>

<llo_original>
// kernel: tpu_custom_call.1
$region0: #{tpu_custom_call.1}
  #allocation0 [shape = 'u32[]', space=smem, size = 0x4, offset = 0x4, fixed_abs, tag = 'smem constant byte address 0x4 - core index']
  #allocation1 [shape = 'u32[72,128]{1,0:T(1,128)}', space=vmem, size = 0x9000, scoped, tag = 'internal scratch']
  #allocation2 [shape = 'f32[16,256]{1,0:T(8,128)}', space=vmem, size = 0x4000, scoped, tag = 'scratch operand']
  #allocation3 [shape = 's32[16]{0}', space=sflag, size = 0x40, scoped, tag = 'scratch operand']
  #allocation4 [shape = 's32[1]{0}', space=sflag, size = 0x4, scoped, tag = 'scoped memory for tpu_custom_call.1']
  #allocation5 [shape = 'u8[512]{0}', space=smem, size = 0x200, scoped, tag = 'prefetched SMEM operand 0']
  #allocation8 [shape = 's32[]', space=sflag, size = 0x4, offset = 0, fixed_abs, tag = 'sflag constant byte address 0x0 - dummy sync flag']
  #allocation9 [shape = 's32[]', space=sflag, size = 0x4, offset = 0, fixed_abs, tag = 'sflag constant byte address 0x0 - dummy sync flag']
  #allocation10 [shape = 's32[]', space=sflag, size = 0x4, offset = 0, fixed_abs, tag = 'sflag constant byte address 0x0 - dummy sync flag']
  #allocation11 [shape = 's32[]', space=sflag, size = 0x4, offset = 0, fixed_abs, tag = 'sflag constant byte address 0x0 - dummy sync flag']
  #allocation12 [shape = 's32[]', space=sflag, size = 0x4, offset = 0, fixed_abs, tag = 'sflag constant byte address 0x0 - dummy sync flag']
  #allocation13 [shape = 's32[]', space=sflag, size = 0x4, offset = 0, fixed_abs, tag = 'sflag constant byte address 0x0 - dummy sync flag']
  #allocation14 [shape = 's32[]', space=sflag, size = 0x4, offset = 0, fixed_abs, tag = 'sflag constant byte address 0x0 - dummy sync flag']
  #allocation15 [shape = 's32[]', space=sflag, size = 0x4, offset = 0, fixed_abs, tag = 'sflag constant byte address 0x0 - dummy sync flag']
  #allocation16 [shape = 's32[]', space=sflag, size = 0x4, offset = 0, fixed_abs, tag = 'sflag constant byte address 0x0 - dummy sync flag']
  #allocation17 [shape = 's32[]', space=sflag, size = 0x4, offset = 0, fixed_abs, tag = 'sflag constant byte address 0x0 - dummy sync flag']
  #allocation18 [shape = 's32[]', space=sflag, size = 0x4, offset = 0, fixed_abs, tag = 'sflag constant byte address 0x0 - dummy sync flag']
  #allocation19 [shape = 's32[]', space=sflag, size = 0x4, offset = 0, fixed_abs, tag = 'sflag constant byte address 0x0 - dummy sync flag']
  #allocation20 [shape = 's32[]', space=sflag, size = 0x4, offset = 0, fixed_abs, tag = 'sflag constant byte address 0x0 - dummy sync flag']
  #allocation21 [shape = 's32[]', space=sflag, size = 0x4, offset = 0, fixed_abs, tag = 'sflag constant byte address 0x0 - dummy sync flag']
  #allocation22 [shape = 's32[]', space=sflag, size = 0x4, offset = 0, fixed_abs, tag = 'sflag constant byte address 0x0 - dummy sync flag']
  #allocation23 [shape = 's32[]', space=sflag, size = 0x4, offset = 0, fixed_abs, tag = 'sflag constant byte address 0x0 - dummy sync flag']
  %s0 = inlined_call_operand.hbm [shape: s32[16], index: 0, kind: input, shape index: {}]
  %s1 = inlined_call_operand.hbm [shape: f32[128,256], index: 1, kind: input, shape index: {}]
  %s2 = inlined_call_operand.hbm [shape: f32[16,256], index: 2, kind: output, shape index: {}]
  %s3 = sld [smem:[#allocation0]]
  $region10: #{tpu_custom_call.1} parent=0
    _
  %s5 = ssub.s32 1, %s3
  %s6 = scalar_select 0, %s5, %s3
  %s8 = sshll.u32 %s0, 4
  %s9 = int_to_ptr.hbm [resolvable:$true] %s8
  %11 = dma.hbm_to_smem %s9, 16, [#allocation5], [#allocation4]
  %13 = dma.done [#allocation4], 16
  %14 = sfence
  $region1: #{tpu_custom_call.1} parent=0
    #allocation6 [shape = 'u8[16384]{0}', space=vmem, size = 0x4000, scoped, tag = 'output window, operand 0, single buffered']
    #allocation7 [shape = 's32[1]{0}', space=sflag, size = 0x4, scoped, tag = 'scoped memory for tpu_custom_call.1']
    %15 = vsyncpa [#allocation7], 0
    %s16 = smul.u32 0, 16
    %s17 = sld [smem:[#allocation5 + %s16]]
    %s18 = sshrl.u32 %s17, 3
    %s19 = sand.u32 %s17, 7
    %s20 = smul.u32 %s18, 16
    %s21 = sadd.s32 %s19, %s20
    %s22 = scalar_lea.hbm %s1, %s21
    %s23 = sshll.u32 %s22, 4
    %s24 = int_to_ptr.hbm [resolvable:$true] %s23
    %s25 = sshll.u32 [#allocation2], 4
    %s26 = int_to_ptr.vmem [resolvable:$true] %s25
    %30 = dma.hbm_to_vmem [thread:$0]  %s24, 32, %s26, [#allocation3], 128, 128, 1
    %s31 = sadd.s32 %s16, 1
    %s32 = sld [smem:[#allocation5 + %s31]]
    %s33 = sshrl.u32 %s32, 3
    %s34 = sand.u32 %s32, 7
    %s35 = smul.u32 %s33, 16
    %s36 = sadd.s32 %s34, %s35
    %s37 = scalar_lea.hbm %s1, %s36
    %s38 = scalar_lea.vmem [#allocation2], 1
    %s39 = scalar_lea.sflag [#allocation3], 1
    %s40 = sshll.u32 %s37, 4
    %s41 = int_to_ptr.hbm [resolvable:$true] %s40
    %s42 = sshll.u32 %s38, 4
    %s43 = int_to_ptr.vmem [resolvable:$true] %s42
    %47 = dma.hbm_to_vmem [thread:$0]  %s41, 32, %s43, %s39, 128, 128, 1
    %s48 = sadd.s32 %s16, 2
    %s49 = sld [smem:[#allocation5 + %s48]]
    %s50 = sshrl.u32 %s49, 3
    %s51 = sand.u32 %s49, 7
    %s52 = smul.u32 %s50, 16
    %s53 = sadd.s32 %s51, %s52
    %s54 = scalar_lea.hbm %s1, %s53
    %s55 = scalar_lea.vmem [#allocation2], 2
    %s56 = scalar_lea.sflag [#allocation3], 2
    %s57 = sshll.u32 %s54, 4
    %s58 = int_to_ptr.hbm [resolvable:$true] %s57
    %s59 = sshll.u32 %s55, 4
    %s60 = int_to_ptr.vmem [resolvable:$true] %s59
    %64 = dma.hbm_to_vmem [thread:$0]  %s58, 32, %s60, %s56, 128, 128, 1
    %s65 = sadd.s32 %s16, 3
    %s66 = sld [smem:[#allocation5 + %s65]]
    %s67 = sshrl.u32 %s66, 3
    %s68 = sand.u32 %s66, 7
    %s69 = smul.u32 %s67, 16
    %s70 = sadd.s32 %s68, %s69
    %s71 = scalar_lea.hbm %s1, %s70
    %s72 = scalar_lea.vmem [#allocation2], 3
    %s73 = scalar_lea.sflag [#allocation3], 3
    %s74 = sshll.u32 %s71, 4
    %s75 = int_to_ptr.hbm [resolvable:$true] %s74
    %s76 = sshll.u32 %s72, 4
    %s77 = int_to_ptr.vmem [resolvable:$true] %s76
    %81 = dma.hbm_to_vmem [thread:$0]  %s75, 32, %s77, %s73, 128, 128, 1
    %s82 = sadd.s32 %s16, 4
    %s83 = sld [smem:[#allocation5 + %s82]]
    %s84 = sshrl.u32 %s83, 3
    %s85 = sand.u32 %s83, 7
    %s86 = smul.u32 %s84, 16
    %s87 = sadd.s32 %s85, %s86
    %s88 = scalar_lea.hbm %s1, %s87
    %s89 = scalar_lea.vmem [#allocation2], 4
    %s90 = scalar_lea.sflag [#allocation3], 4
    %s91 = sshll.u32 %s88, 4
    %s92 = int_to_ptr.hbm [resolvable:$true] %s91
    %s93 = sshll.u32 %s89, 4
    %s94 = int_to_ptr.vmem [resolvable:$true] %s93
    %98 = dma.hbm_to_vmem [thread:$0]  %s92, 32, %s94, %s90, 128, 128, 1
    %s99 = sadd.s32 %s16, 5
    %s100 = sld [smem:[#allocation5 + %s99]]
    %s101 = sshrl.u32 %s100, 3
    %s102 = sand.u32 %s100, 7
    %s103 = smul.u32 %s101, 16
    %s104 = sadd.s32 %s102, %s103
    %s105 = scalar_lea.hbm %s1, %s104
    %s106 = scalar_lea.vmem [#allocation2], 5
    %s107 = scalar_lea.sflag [#allocation3], 5
    %s108 = sshll.u32 %s105, 4
    %s109 = int_to_ptr.hbm [resolvable:$true] %s108
    %s110 = sshll.u32 %s106, 4
    %s111 = int_to_ptr.vmem [resolvable:$true] %s110
    %115 = dma.hbm_to_vmem [thread:$0]  %s109, 32, %s111, %s107, 128, 128, 1
    %s116 = sadd.s32 %s16, 6
    %s117 = sld [smem:[#allocation5 + %s116]]
    %s118 = sshrl.u32 %s117, 3
    %s119 = sand.u32 %s117, 7
    %s120 = smul.u32 %s118, 16
    %s121 = sadd.s32 %s119, %s120
    %s122 = scalar_lea.hbm %s1, %s121
    %s123 = scalar_lea.vmem [#allocation2], 6
    %s124 = scalar_lea.sflag [#allocation3], 6
    %s125 = sshll.u32 %s122, 4
    %s126 = int_to_ptr.hbm [resolvable:$true] %s125
    %s127 = sshll.u32 %s123, 4
    %s128 = int_to_ptr.vmem [resolvable:$true] %s127
    %132 = dma.hbm_to_vmem [thread:$0]  %s126, 32, %s128, %s124, 128, 128, 1
    %s133 = sadd.s32 %s16, 7
    %s134 = sld [smem:[#allocation5 + %s133]]
    %s135 = sshrl.u32 %s134, 3
    %s136 = sand.u32 %s134, 7
    %s137 = smul.u32 %s135, 16
    %s138 = sadd.s32 %s136, %s137
    %s139 = scalar_lea.hbm %s1, %s138
    %s140 = scalar_lea.vmem [#allocation2], 7
    %s141 = scalar_lea.sflag [#allocation3], 7
    %s142 = sshll.u32 %s139, 4
    %s143 = int_to_ptr.hbm [resolvable:$true] %s142
    %s144 = sshll.u32 %s140, 4
    %s145 = int_to_ptr.vmem [resolvable:$true] %s144
    %149 = dma.hbm_to_vmem [thread:$0]  %s143, 32, %s145, %s141, 128, 128, 1
    %s150 = sadd.s32 %s16, 8
    %s151 = sld [smem:[#allocation5 + %s150]]
    %s152 = sshrl.u32 %s151, 3
    %s153 = sand.u32 %s151, 7
    %s154 = smul.u32 %s152, 16
    %s155 = sadd.s32 %s153, %s154
    %s156 = scalar_lea.hbm %s1, %s155
    %s157 = scalar_lea.vmem [#allocation2], 16
    %s158 = scalar_lea.sflag [#allocation3], 8
    %s159 = sshll.u32 %s156, 4
    %s160 = int_to_ptr.hbm [resolvable:$true] %s159
    %s161 = sshll.u32 %s157, 4
    %s162 = int_to_ptr.vmem [resolvable:$true] %s161
    %166 = dma.hbm_to_vmem [thread:$0]  %s160, 32, %s162, %s158, 128, 128, 1
    %s167 = sadd.s32 %s16, 9
    %s168 = sld [smem:[#allocation5 + %s167]]
    %s169 = sshrl.u32 %s168, 3
    %s170 = sand.u32 %s168, 7
    %s171 = smul.u32 %s169, 16
    %s172 = sadd.s32 %s170, %s171
    %s173 = scalar_lea.hbm %s1, %s172
    %s174 = scalar_lea.vmem [#allocation2], 17
    %s175 = scalar_lea.sflag [#allocation3], 9
    %s176 = sshll.u32 %s173, 4
    %s177 = int_to_ptr.hbm [resolvable:$true] %s176
    %s178 = sshll.u32 %s174, 4
    %s179 = int_to_ptr.vmem [resolvable:$true] %s178
    %183 = dma.hbm_to_vmem [thread:$0]  %s177, 32, %s179, %s175, 128, 128, 1
    %s184 = sadd.s32 %s16, 10
    %s185 = sld [smem:[#allocation5 + %s184]]
    %s186 = sshrl.u32 %s185, 3
    %s187 = sand.u32 %s185, 7
    %s188 = smul.u32 %s186, 16
    %s189 = sadd.s32 %s187, %s188
    %s190 = scalar_lea.hbm %s1, %s189
    %s191 = scalar_lea.vmem [#allocation2], 18
    %s192 = scalar_lea.sflag [#allocation3], 10
    %s193 = sshll.u32 %s190, 4
    %s194 = int_to_ptr.hbm [resolvable:$true] %s193
    %s195 = sshll.u32 %s191, 4
    %s196 = int_to_ptr.vmem [resolvable:$true] %s195
    %200 = dma.hbm_to_vmem [thread:$0]  %s194, 32, %s196, %s192, 128, 128, 1
    %s201 = sadd.s32 %s16, 11
    %s202 = sld [smem:[#allocation5 + %s201]]
    %s203 = sshrl.u32 %s202, 3
    %s204 = sand.u32 %s202, 7
    %s205 = smul.u32 %s203, 16
    %s206 = sadd.s32 %s204, %s205
    %s207 = scalar_lea.hbm %s1, %s206
    %s208 = scalar_lea.vmem [#allocation2], 19
    %s209 = scalar_lea.sflag [#allocation3], 11
    %s210 = sshll.u32 %s207, 4
    %s211 = int_to_ptr.hbm [resolvable:$true] %s210
    %s212 = sshll.u32 %s208, 4
    %s213 = int_to_ptr.vmem [resolvable:$true] %s212
    %217 = dma.hbm_to_vmem [thread:$0]  %s211, 32, %s213, %s209, 128, 128, 1
    %s218 = sadd.s32 %s16, 12
    %s219 = sld [smem:[#allocation5 + %s218]]
    %s220 = sshrl.u32 %s219, 3
    %s221 = sand.u32 %s219, 7
    %s222 = smul.u32 %s220, 16
    %s223 = sadd.s32 %s221, %s222
    %s224 = scalar_lea.hbm %s1, %s223
    %s225 = scalar_lea.vmem [#allocation2], 20
    %s226 = scalar_lea.sflag [#allocation3], 12
    %s227 = sshll.u32 %s224, 4
    %s228 = int_to_ptr.hbm [resolvable:$true] %s227
    %s229 = sshll.u32 %s225, 4
    %s230 = int_to_ptr.vmem [resolvable:$true] %s229
    %234 = dma.hbm_to_vmem [thread:$0]  %s228, 32, %s230, %s226, 128, 128, 1
    %s235 = sadd.s32 %s16, 13
    %s236 = sld [smem:[#allocation5 + %s235]]
    %s237 = sshrl.u32 %s236, 3
    %s238 = sand.u32 %s236, 7
    %s239 = smul.u32 %s237, 16
    %s240 = sadd.s32 %s238, %s239
    %s241 = scalar_lea.hbm %s1, %s240
    %s242 = scalar_lea.vmem [#allocation2], 21
    %s243 = scalar_lea.sflag [#allocation3], 13
    %s244 = sshll.u32 %s241, 4
    %s245 = int_to_ptr.hbm [resolvable:$true] %s244
    %s246 = sshll.u32 %s242, 4
    %s247 = int_to_ptr.vmem [resolvable:$true] %s246
    %251 = dma.hbm_to_vmem [thread:$0]  %s245, 32, %s247, %s243, 128, 128, 1
    %s252 = sadd.s32 %s16, 14
    %s253 = sld [smem:[#allocation5 + %s252]]
    %s254 = sshrl.u32 %s253, 3
    %s255 = sand.u32 %s253, 7
    %s256 = smul.u32 %s254, 16
    %s257 = sadd.s32 %s255, %s256
    %s258 = scalar_lea.hbm %s1, %s257
    %s259 = scalar_lea.vmem [#allocation2], 22
    %s260 = scalar_lea.sflag [#allocation3], 14
    %s261 = sshll.u32 %s258, 4
    %s262 = int_to_ptr.hbm [resolvable:$true] %s261
    %s263 = sshll.u32 %s259, 4
    %s264 = int_to_ptr.vmem [resolvable:$true] %s263
    %268 = dma.hbm_to_vmem [thread:$0]  %s262, 32, %s264, %s260, 128, 128, 1
    %s269 = sadd.s32 %s16, 15
    %s270 = sld [smem:[#allocation5 + %s269]]
    %s271 = sshrl.u32 %s270, 3
    %s272 = sand.u32 %s270, 7
    %s273 = smul.u32 %s271, 16
    %s274 = sadd.s32 %s272, %s273
    %s275 = scalar_lea.hbm %s1, %s274
    %s276 = scalar_lea.vmem [#allocation2], 23
    %s277 = scalar_lea.sflag [#allocation3], 15
    %s278 = sshll.u32 %s275, 4
    %s279 = int_to_ptr.hbm [resolvable:$true] %s278
    %s280 = sshll.u32 %s276, 4
    %s281 = int_to_ptr.vmem [resolvable:$true] %s280
    %285 = dma.hbm_to_vmem [thread:$0]  %s279, 32, %s281, %s277, 128, 128, 1
    %287 = dma.done [#allocation3], 32
    %289 = dma.done %s39, 32
    %291 = dma.done %s56, 32
    %293 = dma.done %s73, 32
    %295 = dma.done %s90, 32
    %297 = dma.done %s107, 32
    %299 = dma.done %s124, 32
    %301 = dma.done %s141, 32
    %303 = dma.done %s158, 32
    %305 = dma.done %s175, 32
    %307 = dma.done %s192, 32
    %309 = dma.done %s209, 32
    %311 = dma.done %s226, 32
    %313 = dma.done %s243, 32
    %315 = dma.done %s260, 32
    %317 = dma.done %s277, 32
    %v318 = vld [vmem:[#allocation2] sm:$0xff]
    %v319 = vld [vmem:[#allocation2 + $0x8] sm:$0xff]
    %v320 = vld [vmem:[#allocation2 + $0x10] sm:$0xff]
    %v321 = vld [vmem:[#allocation2 + $0x18] sm:$0xff]
    %322 = vst [vmem:[#allocation6] sm:$0xff] %v318
    %323 = vst [vmem:[#allocation6 + $0x8] sm:$0xff] %v319
    %324 = vst [vmem:[#allocation6 + $0x10] sm:$0xff] %v320
    %325 = vst [vmem:[#allocation6 + $0x18] sm:$0xff] %v321
    // Predicated region
    $region2: #{tpu_custom_call.1} parent=1 // pred_check
      _
    $region3: #{tpu_custom_call.1} parent=1 // pred_check_branch
      %327 = sbr.rel (0) target = $region5
    $region4: #{tpu_custom_call.1} parent=1 // pred_region
      %329 = vsyncadd [#allocation7], 0
      %s330 = sshll.u32 [#allocation6], 4
      %s331 = int_to_ptr.vmem [resolvable:$true] %s330
      %s332 = sshll.u32 %s2, 4
      %s333 = int_to_ptr.hbm [resolvable:$true] %s332
      %338 = dma.vmem_to_hbm [thread:$0]  %s331, 512, %s333, [#allocation7], 256, 256, 16
    $region5: #{tpu_custom_call.1} parent=1 // pred_fallthru
      _
    // Predicated region
    $region6: #{tpu_custom_call.1} parent=1 // pred_check
      _
    $region7: #{tpu_custom_call.1} parent=1 // pred_check_branch
      %340 = sbr.rel (0) target = $region9
    $region8: #{tpu_custom_call.1} parent=1 // pred_region
      %342 = dma.done [#allocation7], 512
    $region9: #{tpu_custom_call.1} parent=1 // pred_fallthru
      _
    %343 = vsyncpa [#allocation7], 1
  %344 = vsyncmov [#allocation3]
  %s345 = vpop.sfrf %344
  %p346 = scmp.eq.s32.totalorder %s345, 0
  %p347 = pneg %p346
  %349 = shalt.err (%p347)
  %s350 = scalar_lea.sflag [#allocation3], 1
  %351 = vsyncmov %s350
  %s352 = vpop.sfrf %351
  %p353 = scmp.eq.s32.totalorder %s352, 0
  %p354 = pneg %p353
  %356 = shalt.err (%p354)
  %s357 = scalar_lea.sflag [#allocation3], 2
  %358 = vsyncmov %s357
  %s359 = vpop.sfrf %358
  %p360 = scmp.eq.s32.totalorder %s359, 0
  %p361 = pneg %p360
  %363 = shalt.err (%p361)
  %s364 = scalar_lea.sflag [#allocation3], 3
  %365 = vsyncmov %s364
  %s366 = vpop.sfrf %365
  %p367 = scmp.eq.s32.totalorder %s366, 0
  %p368 = pneg %p367
  %370 = shalt.err (%p368)
  %s371 = scalar_lea.sflag [#allocation3], 4
  %372 = vsyncmov %s371
  %s373 = vpop.sfrf %372
  %p374 = scmp.eq.s32.totalorder %s373, 0
  %p375 = pneg %p374
  %377 = shalt.err (%p375)
  %s378 = scalar_lea.sflag [#allocation3], 5
  %379 = vsyncmov %s378
  %s380 = vpop.sfrf %379
  %p381 = scmp.eq.s32.totalorder %s380, 0
  %p382 = pneg %p381
  %384 = shalt.err (%p382)
  %s385 = scalar_lea.sflag [#allocation3], 6
  %386 = vsyncmov %s385
  %s387 = vpop.sfrf %386
  %p388 = scmp.eq.s32.totalorder %s387, 0
  %p389 = pneg %p388
  %391 = shalt.err (%p389)
  %s392 = scalar_lea.sflag [#allocation3], 7
  %393 = vsyncmov %s392
  %s394 = vpop.sfrf %393
  %p395 = scmp.eq.s32.totalorder %s394, 0
  %p396 = pneg %p395
  %398 = shalt.err (%p396)
  %s399 = scalar_lea.sflag [#allocation3], 8
  %400 = vsyncmov %s399
  %s401 = vpop.sfrf %400
  %p402 = scmp.eq.s32.totalorder %s401, 0
  %p403 = pneg %p402
  %405 = shalt.err (%p403)
  %s406 = scalar_lea.sflag [#allocation3], 9
  %407 = vsyncmov %s406
  %s408 = vpop.sfrf %407
  %p409 = scmp.eq.s32.totalorder %s408, 0
  %p410 = pneg %p409
  %412 = shalt.err (%p410)
  %s413 = scalar_lea.sflag [#allocation3], 10
  %414 = vsyncmov %s413
  %s415 = vpop.sfrf %414
  %p416 = scmp.eq.s32.totalorder %s415, 0
  %p417 = pneg %p416
  %419 = shalt.err (%p417)
  %s420 = scalar_lea.sflag [#allocation3], 11
  %421 = vsyncmov %s420
  %s422 = vpop.sfrf %421
  %p423 = scmp.eq.s32.totalorder %s422, 0
  %p424 = pneg %p423
  %426 = shalt.err (%p424)
  %s427 = scalar_lea.sflag [#allocation3], 12
  %428 = vsyncmov %s427
  %s429 = vpop.sfrf %428
  %p430 = scmp.eq.s32.totalorder %s429, 0
  %p431 = pneg %p430
  %433 = shalt.err (%p431)
  %s434 = scalar_lea.sflag [#allocation3], 13
  %435 = vsyncmov %s434
  %s436 = vpop.sfrf %435
  %p437 = scmp.eq.s32.totalorder %s436, 0
  %p438 = pneg %p437
  %440 = shalt.err (%p438)
  %s441 = scalar_lea.sflag [#allocation3], 14
  %442 = vsyncmov %s441
  %s443 = vpop.sfrf %442
  %p444 = scmp.eq.s32.totalorder %s443, 0
  %p445 = pneg %p444
  %447 = shalt.err (%p445)
  %s448 = scalar_lea.sflag [#allocation3], 15
  %449 = vsyncmov %s448
  %s450 = vpop.sfrf %449
  %p451 = scmp.eq.s32.totalorder %s450, 0
  %p452 = pneg %p451
  %454 = shalt.err (%p452)

</llo_original>
